<compile_context>
chip_gen: v5e
topology: v5e:2x2
jax: 0.10.0
libtpu: 0.0.40
codegen_flags: <defaults>
</compile_context>

<pallas_src>
import numpy as np
import jax
import jax.numpy as jnp
from jax.experimental import pallas as pl
from jax.experimental.pallas import tpu as pltpu
from scipy.optimize import linear_sum_assignment


_BIG = 1000000.0       # sentinel used by the reference cost matrix
_ROW_TILE_MAX = 512    # cost-matrix row tile at production scale (v7x VMEM-safe)


def _round_up(x, m):
    return -(-x // m) * m


# ----------------------------- Pallas kernel --------------------------------

def _interaction_kernel(veh_ref, inf_t_ref, x_ref, w_ref, b_ref,
                        cost_ref, lin_ref):
    """Fused cross-agent interaction kernel.

    veh_ref:  [tm, 8]   f32   cols 0..2 xyz, 3..5 log box dims, 6 score mask
    inf_t_ref:[8, Nip]  f32   rows 0..2 = inf xyz (transposed), pad cols = 1e8
    x_ref:    [Ni, 2C]  bf16  concat(inf query_embeds, inf query_feats)
    w_ref:    [2C, P]   bf16  block weight [[w_pos,0,0],[0,w_aln,w_aln@w_fus]]
    b_ref:    [1, P]    f32   packed biases (rotation + fusion terms pre-folded)
    cost_ref: [tm, Nip] f32   matching cost (lane-dense padded)
    lin_ref:  [Ni, P]   f32   packed [aligned embeds | aligned feats | fused]
    """
    big = jnp.float32(_BIG)

    # ---- pairwise cost on the VPU: per-coordinate diffs reused for the
    #      distance and the inside-box mask (fixes the |v|^2+|i|^2-2v.i f32
    #      cancellation and removes the MXU/XLU work of the old formulation).
    v = veh_ref[...]                       # [tm, 8]
    it = inf_t_ref[...]                    # [8, Nip]
    dx = v[:, 0:1] - it[0:1, :]            # [tm, Nip]
    dy = v[:, 1:2] - it[1:2, :]
    dz = v[:, 2:3] - it[2:3, :]
    dist = jnp.sqrt(dx * dx + dy * dy + dz * dz)
    dims = jnp.exp(v[:, 3:6])              # single EUP exp, [tm, 3]
    ok = ((jnp.abs(dx) <= dims[:, 0:1]) &
          (jnp.abs(dy) <= dims[:, 1:2]) &
          (jnp.abs(dz) <= dims[:, 2:3]) &
          (v[:, 6:7] > 0.5))               # score row mask folded in
    cost_ref[...] = jnp.where(ok, dist, big)

    # ---- all three linears as ONE lane-dense MXU dot; computed once per
    #      launch (the row-tile grid axis revisits the same output block).
    @pl.when(pl.program_id(0) == 0)
    def _():
        acc = jnp.dot(x_ref[...], w_ref[...],
                      preferred_element_type=jnp.float32) + b_ref[...]
        lin_ref[...] = acc.astype(lin_ref.dtype)


def _fused_interaction(veh_info, inf_t, x_packed, w_block, bias, *, tm):
    Nvp = veh_info.shape[0]
    Nip = inf_t.shape[1]
    Ni, K2 = x_packed.shape
    P = w_block.shape[1]
    # TODO(synk): at production scale, split the grid-invariant linear block
    #             into its own tiny pallas_call so this row axis can be marked
    #             "parallel" and sharded across both v7x TensorCores.
    return pl.pallas_call(
        _interaction_kernel,
        out_shape=(
            jax.ShapeDtypeStruct((Nvp, Nip), jnp.float32),
            jax.ShapeDtypeStruct((Ni, P), jnp.float32),
        ),
        grid=(Nvp // tm,),
        in_specs=[
            pl.BlockSpec((tm, 8), lambda i: (i, 0)),
            pl.BlockSpec((8, Nip), lambda i: (0, 0)),
            pl.BlockSpec((Ni, K2), lambda i: (0, 0)),
            pl.BlockSpec((K2, P), lambda i: (0, 0)),
            pl.BlockSpec((1, P), lambda i: (0, 0)),
        ],
        out_specs=(
            pl.BlockSpec((tm, Nip), lambda i: (i, 0)),
            pl.BlockSpec((Ni, P), lambda i: (0, 0)),
        ),
        compiler_params=pltpu.CompilerParams(
            dimension_semantics=("arbitrary",)),
    )(veh_info, inf_t, x_packed, w_block, bias)


# --------------------------- jitted device glue ------------------------------

def _loc_denorm(ref_pts, pc):
    scale = jnp.stack([pc[3] - pc[0], pc[4] - pc[1], pc[5] - pc[2]])
    offs = jnp.stack([pc[0], pc[1], pc[2]])
    return ref_pts * scale[None, :] + offs[None, :]


def _loc_norm(locs, pc):
    scale = jnp.stack([pc[3] - pc[0], pc[4] - pc[1], pc[5] - pc[2]])
    offs = jnp.stack([pc[0], pc[1], pc[2]])
    return (locs - offs[None, :]) / scale[None, :]


@jax.jit
def _device_stage1(params, inf, veh, keep_idx, calib, pc_range, inf_pc_range):
    """Gather surviving inf rows, transform points, run the fused kernel."""
    inf = {k: v[keep_idx] for k, v in inf.items()}
    inf["obj_idxes"] = jnp.full_like(inf["obj_idxes"], -1)

    inf_pts = _loc_denorm(inf["ref_pts"], inf_pc_range)
    veh_pts = _loc_denorm(veh["ref_pts"], pc_range)
    pts4 = jnp.concatenate([inf_pts, jnp.ones_like(inf_pts[..., :1])], axis=-1)
    inf_pts = (pts4 @ calib.T)[..., :3]

    inf_new = dict(inf)
    veh_new = dict(veh)
    inf_new["ref_pts"] = _loc_norm(inf_pts, pc_range)
    veh_new["ref_pts"] = _loc_norm(veh_pts, pc_range)

    Nv = veh_pts.shape[0]
    Ni = inf_pts.shape[0]                  # bucketed to a multiple of 8 by host
    C = veh["query_feats"].shape[-1]

    # cost-matrix padding: sublane-aligned rows, lane-dense (x128) columns;
    # tile rows at 512 so one block stays well inside v7x's 64 MiB VMEM.
    Nvp = _round_up(Nv, 8)
    tm = Nvp
    if Nvp > _ROW_TILE_MAX:
        Nvp = _round_up(Nv, _ROW_TILE_MAX)
        tm = _ROW_TILE_MAX
    Nip = _round_up(Ni, 128)

    log_dims = veh["pred_boxes"][:, jnp.asarray([2, 3, 5])]
    score_mask = (veh["scores"] >= 0.05).astype(jnp.float32)[:, None]
    veh_info = jnp.concatenate(
        [veh_pts, log_dims, score_mask, jnp.zeros((Nv, 1), jnp.float32)], -1)
    veh_info = jnp.pad(veh_info, ((0, Nvp - Nv), (0, 0)))            # [Nvp, 8]
    inf_t = jnp.pad(inf_pts.T, ((0, 5), (0, Nip - Ni)),
                    constant_values=1e8)                             # [8, Nip]

    # Fold the constant rotation (9-dim) tail of both (C+9)->C linears into
    # their biases, and fold the fusion linear into the alignment weights so
    # all three linears become one block dot (re-association rounding only).
    r9 = calib[:3, :3].reshape(1, 9)
    w_pos, b_pos = params["align_pos_w"], params["align_pos_b"]
    w_aln, b_aln = params["align_w"], params["align_b"]
    w_fus, b_fus = params["fusion_w"], params["fusion_b"]
    bias_pos = r9 @ w_pos[C:] + b_pos[None, :]                       # [1, C]
    bias_aln = r9 @ w_aln[C:] + b_aln[None, :]                       # [1, C]
    w_ff = w_aln[:C] @ w_fus                                         # [C, C]
    bias_ff = bias_aln @ w_fus + b_fus[None, :]                      # [1, C]

    P = _round_up(3 * C, 128)
    zc = jnp.zeros((C, C), jnp.float32)
    w_block = jnp.concatenate([
        jnp.concatenate([w_pos[:C], zc, zc], axis=1),
        jnp.concatenate([zc, w_aln[:C], w_ff], axis=1)], axis=0)     # [2C, 3C]
    w_block = jnp.pad(w_block, ((0, 0), (0, P - 3 * C)))
    bias = jnp.pad(jnp.concatenate([bias_pos, bias_aln, bias_ff], 1),
                   ((0, 0), (0, P - 3 * C)))                         # [1, P]

    x_packed = jnp.concatenate(
        [inf["query_embeds"], inf["query_feats"]], axis=-1)          # [Ni, 2C]

    cost_pad, lin = _fused_interaction(
        veh_info, inf_t,
        x_packed.astype(jnp.bfloat16),        # bf16 operands, f32 accumulation
        w_block.astype(jnp.bfloat16),
        bias, tm=tm)

    inf_new["query_embeds"] = lin[:, 0:C]
    inf_new["query_feats"] = lin[:, C:2 * C]
    fus = lin[:, 2 * C:3 * C]
    # slice off the lane/row padding on device so the D2H transfer is minimal
    cost = cost_pad[:Nv, :Ni]
    return cost, inf_new, veh_new, fus


@jax.jit
def _device_assemble(veh, inf, fus, gather_veh, gather_inf, from_inf, add_fus):
    """Fixed-shape assembly: [matched veh (+fused inf feats) | unmatched inf |
    top-k unmatched veh] expressed as per-row gathers + selects so the jitted
    shapes never depend on the match count (no recompiles)."""
    n = gather_veh.shape[0]
    out = {}
    for k in veh:
        v_part = veh[k][gather_veh]
        i_part = inf[k][gather_inf]
        m = from_inf.reshape((n,) + (1,) * (v_part.ndim - 1))
        val = jnp.where(m, i_part, v_part)
        if k == "query_feats":
            af = add_fus.reshape((n,) + (1,) * (v_part.ndim - 1))
            val = val + jnp.where(af, fus[gather_inf], jnp.zeros_like(v_part))
        out[k] = val
    return out


# ----------------------------- forward wrapper -------------------------------

def cross_agent_sparse_interaction(params, inf, veh, veh2inf_rt,
                                   pc_range, inf_pc_range, embed_dims):
    """Functional port of CrossAgentSparseInteraction.forward.

    `inf` / `veh` are dicts of arrays with identical keys:
      obj_idxes [N], ref_pts [N,3], scores [N], pred_boxes [N,10],
      query_feats [N,C], query_embeds [N,C].
    Returns (result_dict, num_inf_kept).
    """
    # ---- host sync #1: batch everything the host needs up front ----
    obj_np, veh_scores_np, v2i_np = jax.device_get(
        (inf["obj_idxes"], veh["scores"], veh2inf_rt))
    obj_np = np.asarray(obj_np)
    veh_scores_np = np.asarray(veh_scores_np)
    keep = np.where(obj_np >= 0)[0]
    if keep.size == 0:
        return veh, 0

    Nv = int(veh_scores_np.shape[0])
    Ni = int(keep.size)
    # bucket the inf row count to a multiple of 8: jit/Pallas shapes only
    # change per bucket and the [Ni, *] kernel outputs are sublane-aligned.
    Ni_pad = _round_up(Ni, 8)
    keep_pad = np.concatenate(
        [keep, np.zeros(Ni_pad - Ni, keep.dtype)]).astype(np.int32)

    calib_np = np.linalg.inv(np.asarray(v2i_np, np.float64).T).astype(np.float32)

    cost_dev, inf_new, veh_new, fus = _device_stage1(
        params, inf, veh, jnp.asarray(keep_pad),
        jnp.asarray(calib_np),
        jnp.asarray(pc_range, jnp.float32),
        jnp.asarray(inf_pc_range, jnp.float32))

    # kick off the D2H copy early so it overlaps the remaining host prep
    if hasattr(cost_dev, "copy_to_host_async"):
        cost_dev.copy_to_host_async()

    # ---- host sync #2: cost matrix for the Hungarian solver ----
    # TODO(synk): scipy.linear_sum_assignment has no Pallas equivalent; it runs
    #             on the host exactly as in the PyTorch reference.
    cost_np = np.asarray(jax.device_get(cost_dev), np.float64)[:Nv, :Ni]
    veh_idx, inf_idx = linear_sum_assignment(cost_np)

    # accepted matches (same 1e5 threshold vs 1e6 sentinel as the reference)
    accept = cost_np[veh_idx, inf_idx] < 100000.0
    veh_acc = veh_idx[accept].astype(np.int32)
    inf_acc = inf_idx[accept].astype(np.int32)

    # query complementation bookkeeping (host numpy, reuses prefetched scores)
    vmask = np.ones(Nv, dtype=bool)
    vmask[veh_acc] = False
    imask = np.ones(Ni, dtype=bool)
    imask[inf_acc] = False
    inf_unm = np.where(imask)[0].astype(np.int32)
    unmatched_veh = np.where(vmask)[0]
    # NOTE: the reference assumes veh_num >= inf_num (torch.topk would raise on
    #       negative k); clamp so the select count never goes negative.
    select_num = max(Nv - Ni, 0)
    order = np.argsort(-veh_scores_np[unmatched_veh],
                       kind="stable")[:select_num]
    topk_idx = unmatched_veh[order].astype(np.int32)

    # fixed-shape gather/select plan: [matched veh | unmatched inf | top-k veh]
    m = int(veh_acc.size)
    u = int(inf_unm.size)
    out_len = m + u + int(topk_idx.size)       # == max(Nv, Ni), constant
    gather_veh = np.zeros(out_len, np.int32)
    gather_inf = np.zeros(out_len, np.int32)
    from_inf = np.zeros(out_len, bool)
    add_fus = np.zeros(out_len, bool)
    gather_veh[:m] = veh_acc
    gather_inf[:m] = inf_acc
    add_fus[:m] = True
    gather_inf[m:m + u] = inf_unm
    from_inf[m:m + u] = True
    gather_veh[m + u:] = topk_idx

    result = _device_assemble(
        veh_new, inf_new, fus,
        jnp.asarray(gather_veh), jnp.asarray(gather_inf),
        jnp.asarray(from_inf), jnp.asarray(add_fus))
    return result, Ni


# ----------------------------- param init -----------------------------------

def _xavier(key, fan_in, fan_out):
    bound = float(np.sqrt(6.0 / (fan_in + fan_out)))
    return jax.random.uniform(key, (fan_in, fan_out), jnp.float32, -bound, bound)


def _bias(key, fan_in, fan_out):
    bound = float(1.0 / np.sqrt(fan_in))
    return jax.random.uniform(key, (fan_out,), jnp.float32, -bound, bound)


def init_params(key, embed_dims):
    ks = jax.random.split(key, 8)
    C = embed_dims
    return {
        # get_pos_embedding (3 -> C): present in the module, unused in forward()
        "pos_embed_w": _xavier(ks[0], 3, C),
        "pos_embed_b": _bias(ks[1], 3, C),
        "align_w": _xavier(ks[2], C + 9, C),
        "align_b": _bias(ks[3], C + 9, C),
        "align_pos_w": _xavier(ks[4], C + 9, C),
        "align_pos_b": _bias(ks[5], C + 9, C),
        "fusion_w": _xavier(ks[6], C, C),
        "fusion_b": _bias(ks[7], C, C),
    }


# ----------------------------- example run ----------------------------------

if __name__ == "__main__":
    embed_dims = 32
    Nv, Ni0 = 20, 12
    pc_range = [-51.2, -51.2, -5.0, 51.2, 51.2, 3.0]
    inf_pc_range = [-51.2, -51.2, -5.0, 51.2, 51.2, 3.0]

    key = jax.random.PRNGKey(0)
    kp, k1, k2, k3, k4, k5, k6, k7, k8 = jax.random.split(key, 9)
    params = init_params(kp, embed_dims)

    # vehicle-side instances
    veh = {
        "obj_idxes": jnp.arange(Nv, dtype=jnp.float32),
        "ref_pts": jax.random.uniform(k1, (Nv, 3), jnp.float32, 0.05, 0.95),
        "scores": jax.random.uniform(k2, (Nv,), jnp.float32, 0.0, 1.0),
        "pred_boxes": jax.random.uniform(k3, (Nv, 10), jnp.float32, -1.0, 1.0),
        "query_feats": jax.random.normal(k4, (Nv, embed_dims), jnp.float32),
        "query_embeds": jax.random.normal(k5, (Nv, embed_dims), jnp.float32),
    }
    # large log-dims at cols [2,3,5] so the distance filter admits some matches
    veh["pred_boxes"] = veh["pred_boxes"].at[:, jnp.asarray([2, 3, 5])].set(4.0)

    # infrastructure-side instances (some obj_idxes < 0 are filtered out)
    inf_obj = jnp.asarray([0, -1, 1, 2, -1, 3, 4, -1, 5, 6, -1, 7], jnp.float32)
    inf = {
        "obj_idxes": inf_obj,
        "ref_pts": jax.random.uniform(k6, (Ni0, 3), jnp.float32, 0.05, 0.95),
        "scores": jax.random.uniform(k7, (Ni0,), jnp.float32, 0.0, 1.0),
        "pred_boxes": jax.random.uniform(k8, (Ni0, 10), jnp.float32, -1.0, 1.0),
        "query_feats": jax.random.normal(k1, (Ni0, embed_dims), jnp.float32),
        "query_embeds": jax.random.normal(k2, (Ni0, embed_dims), jnp.float32),
    }

    # veh2inf_rt: stored so that inv(veh2inf_rt.T) is the inf->veh calibration
    theta = 0.1
    R = np.array([[np.cos(theta), -np.sin(theta), 0.0],
                  [np.sin(theta), np.cos(theta), 0.0],
                  [0.0, 0.0, 1.0]], dtype=np.float64)
    T = np.eye(4, dtype=np.float64)
    T[:3, :3] = R
    T[:3, 3] = [5.0, -3.0, 0.2]
    veh2inf_rt = jnp.asarray(np.linalg.inv(T).T, jnp.float32)

    result, n_inf = cross_agent_sparse_interaction(
        params, inf, veh, veh2inf_rt, pc_range, inf_pc_range, embed_dims)

    jax.block_until_ready(result)
    assert result["query_feats"].shape == (Nv, embed_dims)
    assert result["query_embeds"].shape == (Nv, embed_dims)
    assert result["ref_pts"].shape == (Nv, 3)
    assert result["scores"].shape == (Nv,)
    assert n_inf == 8
    print("KERNEL_OK")
</pallas_src>

<mosaic_0001>
module attributes {stable_mosaic.version = 11 : i64} {
  func.func @_interaction_kernel(%arg0: i32, %arg1: memref<24x8xf32, #tpu.memory_space<vmem>>, %arg2: memref<8x128xf32, #tpu.memory_space<vmem>>, %arg3: memref<8x64xbf16, #tpu.memory_space<vmem>>, %arg4: memref<64x128xbf16, #tpu.memory_space<vmem>>, %arg5: memref<1x128xf32, #tpu.memory_space<vmem>>, %arg6: memref<24x128xf32, #tpu.memory_space<vmem>>, %arg7: memref<8x128xf32, #tpu.memory_space<vmem>>) attributes {dimension_semantics = [#tpu.dimension_semantics<arbitrary>], iteration_bounds = array<i64: 1>, scalar_prefetch = 0 : i64, scratch_operands = 0 : i64, tpu.core_type = #tpu.core_type<tc>, window_params = [{transform_indices = @transform_0, window_bounds = array<i64: 24, 8>}, {pipeline_mode = #tpu.pipeline_mode<synchronous>, transform_indices = @transform_1, window_bounds = array<i64: 8, 128>}, {pipeline_mode = #tpu.pipeline_mode<synchronous>, transform_indices = @transform_2, window_bounds = array<i64: 8, 64>}, {pipeline_mode = #tpu.pipeline_mode<synchronous>, transform_indices = @transform_3, window_bounds = array<i64: 64, 128>}, {pipeline_mode = #tpu.pipeline_mode<synchronous>, transform_indices = @transform_4, window_bounds = array<i64: 1, 128>}, {transform_indices = @transform_5, window_bounds = array<i64: 24, 128>}, {pipeline_mode = #tpu.pipeline_mode<synchronous>, transform_indices = @transform_6, window_bounds = array<i64: 8, 128>}]} {
    %c0 = arith.constant 0 : index
    %c0_0 = arith.constant 0 : index
    %0 = vector.load %arg1[%c0, %c0_0] : memref<24x8xf32, #tpu.memory_space<vmem>>, vector<24x8xf32>
    %c0_1 = arith.constant 0 : index
    %c0_2 = arith.constant 0 : index
    %1 = vector.load %arg2[%c0_1, %c0_2] : memref<8x128xf32, #tpu.memory_space<vmem>>, vector<8x128xf32>
    %2 = vector.extract_strided_slice %0 {offsets = [0, 0], sizes = [24, 1], strides = [1, 1]} : vector<24x8xf32> to vector<24x1xf32>
    %3 = vector.extract_strided_slice %1 {offsets = [0, 0], sizes = [1, 128], strides = [1, 1]} : vector<8x128xf32> to vector<1x128xf32>
    %4 = vector.broadcast %2 : vector<24x1xf32> to vector<24x128xf32>
    %5 = vector.broadcast %3 : vector<1x128xf32> to vector<24x128xf32>
    %6 = arith.subf %4, %5 : vector<24x128xf32>
    %7 = vector.extract_strided_slice %0 {offsets = [0, 1], sizes = [24, 1], strides = [1, 1]} : vector<24x8xf32> to vector<24x1xf32>
    %8 = vector.extract_strided_slice %1 {offsets = [1, 0], sizes = [1, 128], strides = [1, 1]} : vector<8x128xf32> to vector<1x128xf32>
    %9 = vector.broadcast %7 : vector<24x1xf32> to vector<24x128xf32>
    %10 = vector.broadcast %8 : vector<1x128xf32> to vector<24x128xf32>
    %11 = arith.subf %9, %10 : vector<24x128xf32>
    %12 = vector.extract_strided_slice %0 {offsets = [0, 2], sizes = [24, 1], strides = [1, 1]} : vector<24x8xf32> to vector<24x1xf32>
    %13 = vector.extract_strided_slice %1 {offsets = [2, 0], sizes = [1, 128], strides = [1, 1]} : vector<8x128xf32> to vector<1x128xf32>
    %14 = vector.broadcast %12 : vector<24x1xf32> to vector<24x128xf32>
    %15 = vector.broadcast %13 : vector<1x128xf32> to vector<24x128xf32>
    %16 = arith.subf %14, %15 : vector<24x128xf32>
    %17 = arith.mulf %6, %6 : vector<24x128xf32>
    %18 = arith.mulf %11, %11 : vector<24x128xf32>
    %19 = arith.addf %17, %18 : vector<24x128xf32>
    %20 = arith.mulf %16, %16 : vector<24x128xf32>
    %21 = arith.addf %19, %20 : vector<24x128xf32>
    %22 = math.sqrt %21 : vector<24x128xf32>
    %23 = vector.extract_strided_slice %0 {offsets = [0, 3], sizes = [24, 3], strides = [1, 1]} : vector<24x8xf32> to vector<24x3xf32>
    %24 = math.exp %23 : vector<24x3xf32>
    %25 = math.absf %6 : vector<24x128xf32>
    %26 = vector.extract_strided_slice %24 {offsets = [0, 0], sizes = [24, 1], strides = [1, 1]} : vector<24x3xf32> to vector<24x1xf32>
    %27 = vector.broadcast %26 : vector<24x1xf32> to vector<24x128xf32>
    %28 = arith.cmpf ole, %25, %27 : vector<24x128xf32>
    %29 = math.absf %11 : vector<24x128xf32>
    %30 = vector.extract_strided_slice %24 {offsets = [0, 1], sizes = [24, 1], strides = [1, 1]} : vector<24x3xf32> to vector<24x1xf32>
    %31 = vector.broadcast %30 : vector<24x1xf32> to vector<24x128xf32>
    %32 = arith.cmpf ole, %29, %31 : vector<24x128xf32>
    %33 = arith.andi %28, %32 : vector<24x128xi1>
    %34 = math.absf %16 : vector<24x128xf32>
    %35 = vector.extract_strided_slice %24 {offsets = [0, 2], sizes = [24, 1], strides = [1, 1]} : vector<24x3xf32> to vector<24x1xf32>
    %36 = vector.broadcast %35 : vector<24x1xf32> to vector<24x128xf32>
    %37 = arith.cmpf ole, %34, %36 : vector<24x128xf32>
    %38 = arith.andi %33, %37 : vector<24x128xi1>
    %39 = vector.extract_strided_slice %0 {offsets = [0, 6], sizes = [24, 1], strides = [1, 1]} : vector<24x8xf32> to vector<24x1xf32>
    %cst = arith.constant 5.000000e-01 : f32
    %40 = vector.broadcast %cst : f32 to vector<24x1xf32>
    %41 = arith.cmpf ogt, %39, %40 : vector<24x1xf32>
    %42 = vector.broadcast %41 : vector<24x1xi1> to vector<24x128xi1>
    %43 = arith.andi %38, %42 : vector<24x128xi1>
    %cst_3 = arith.constant 1.000000e+06 : f32
    %44 = vector.broadcast %cst_3 : f32 to vector<24x128xf32>
    %45 = arith.select %43, %22, %44 : vector<24x128xi1>, vector<24x128xf32>
    %c0_4 = arith.constant 0 : index
    %c0_5 = arith.constant 0 : index
    %46 = vector.load %arg6[%c0_4, %c0_5] : memref<24x128xf32, #tpu.memory_space<vmem>>, vector<24x128xf32>
    tpu.vector_store %arg6[%c0_4, %c0_5], %45 {strides = array<i32>} : memref<24x128xf32, #tpu.memory_space<vmem>>, vector<24x128xf32>,
    %c0_i32 = arith.constant 0 : i32
    %47 = arith.cmpi eq, %arg0, %c0_i32 : i32
    %48 = arith.extui %47 : i1 to i32
    %c0_i32_6 = arith.constant 0 : i32
    %49 = arith.cmpi ne, %48, %c0_i32_6 : i32
    scf.if %49 {
      %c0_7 = arith.constant 0 : index
      %c0_8 = arith.constant 0 : index
      %50 = vector.load %arg3[%c0_7, %c0_8] : memref<8x64xbf16, #tpu.memory_space<vmem>>, vector<8x64xbf16>
      %c0_9 = arith.constant 0 : index
      %c0_10 = arith.constant 0 : index
      %51 = vector.load %arg4[%c0_9, %c0_10] : memref<64x128xbf16, #tpu.memory_space<vmem>>, vector<64x128xbf16>
      %cst_11 = arith.constant dense<0.000000e+00> : vector<8x128xf32>
      %52 = tpu.matmul %50, %51, %cst_11 {dimension_numbers = #tpu.dot_dimension_numbers<[1], [0], [0], [1], [0, 0, 1, 1], [], []>} : vector<8x64xbf16>, vector<64x128xbf16>, vector<8x128xf32> -> vector<8x128xf32>
      %c0_12 = arith.constant 0 : index
      %c0_13 = arith.constant 0 : index
      %53 = vector.load %arg5[%c0_12, %c0_13] : memref<1x128xf32, #tpu.memory_space<vmem>>, vector<1x128xf32>
      %54 = vector.broadcast %53 : vector<1x128xf32> to vector<8x128xf32>
      %55 = arith.addf %52, %54 : vector<8x128xf32>
      %c0_14 = arith.constant 0 : index
      %c0_15 = arith.constant 0 : index
      %56 = vector.load %arg7[%c0_14, %c0_15] : memref<8x128xf32, #tpu.memory_space<vmem>>, vector<8x128xf32>
      tpu.vector_store %arg7[%c0_14, %c0_15], %55 {strides = array<i32>} : memref<8x128xf32, #tpu.memory_space<vmem>>, vector<8x128xf32>,
    } else {
    }
    return
  }
  func.func @transform_0(%arg0: i32) -> (i32, i32) {
    %c0_i32 = arith.constant 0 : i32
    %c0_i32_0 = arith.constant 0 : i32
    return %arg0, %c0_i32 : i32, i32
  }
  func.func @transform_1(%arg0: i32) -> (i32, i32) {
    %c0_i32 = arith.constant 0 : i32
    %c0_i32_0 = arith.constant 0 : i32
    %c0_i32_1 = arith.constant 0 : i32
    return %c0_i32, %c0_i32_0 : i32, i32
  }
  func.func @transform_2(%arg0: i32) -> (i32, i32) {
    %c0_i32 = arith.constant 0 : i32
    %c0_i32_0 = arith.constant 0 : i32
    %c0_i32_1 = arith.constant 0 : i32
    return %c0_i32, %c0_i32_0 : i32, i32
  }
  func.func @transform_3(%arg0: i32) -> (i32, i32) {
    %c0_i32 = arith.constant 0 : i32
    %c0_i32_0 = arith.constant 0 : i32
    %c0_i32_1 = arith.constant 0 : i32
    return %c0_i32, %c0_i32_0 : i32, i32
  }
  func.func @transform_4(%arg0: i32) -> (i32, i32) {
    %c0_i32 = arith.constant 0 : i32
    %c0_i32_0 = arith.constant 0 : i32
    %c0_i32_1 = arith.constant 0 : i32
    return %c0_i32, %c0_i32_0 : i32, i32
  }
  func.func @transform_5(%arg0: i32) -> (i32, i32) {
    %c0_i32 = arith.constant 0 : i32
    %c0_i32_0 = arith.constant 0 : i32
    return %arg0, %c0_i32 : i32, i32
  }
  func.func @transform_6(%arg0: i32) -> (i32, i32) {
    %c0_i32 = arith.constant 0 : i32
    %c0_i32_0 = arith.constant 0 : i32
    %c0_i32_1 = arith.constant 0 : i32
    return %c0_i32, %c0_i32_0 : i32, i32
  }
}

</mosaic_0001>

<llo_original>
// kernel: _device_stage1.1
$region0: #{_device_stage1.1}
  #allocation0 [shape = 'u32[]', space=smem, size = 0x4, offset = 0x4, fixed_abs, tag = 'smem constant byte address 0x4 - core index']
  #allocation1 [shape = 'u32[72,128]{1,0:T(1,128)}', space=vmem, size = 0x9000, scoped, tag = 'internal scratch']
  %s0 = inlined_call_operand.vmem [shape: f32[24,8], index: 0, kind: input, shape index: {}]
  %s1 = inlined_call_operand.vmem [shape: f32[8,128], index: 1, kind: input, shape index: {}]
  %s2 = inlined_call_operand.vmem [shape: bf16[8,64], index: 2, kind: input, shape index: {}]
  %s3 = inlined_call_operand.vmem [shape: bf16[64,128], index: 3, kind: input, shape index: {}]
  %s4 = inlined_call_operand.vmem [shape: f32[1,128], index: 4, kind: input, shape index: {}]
  %s5 = inlined_call_operand.vmem [shape: f32[24,128], index: 5, kind: output, shape index: {0}]
  %s6 = inlined_call_operand.vmem [shape: f32[8,128], index: 6, kind: output, shape index: {1}]
  %7 = xla_tuple %s5, %s6
  %s8 = sld [smem:[#allocation0]]
  $region42: #{_device_stage1.1} parent=0
    _
  %s10 = ssub.s32 1, %s8
  %s11 = scalar_select 0, %s10, %s8
  // Predicated region
  $region2: #{_device_stage1.1} parent=0 // pred_check
    _
  $region3: #{_device_stage1.1} parent=0 // pred_check_branch
    %13 = sbr.rel (0) target = $region5
  $region4: #{_device_stage1.1} parent=0 // pred_region
    _
  $region5: #{_device_stage1.1} parent=0 // pred_fallthru
    _
  // Predicated region
  $region6: #{_device_stage1.1} parent=0 // pred_check
    _
  $region7: #{_device_stage1.1} parent=0 // pred_check_branch
    %15 = sbr.rel (0) target = $region9
  $region8: #{_device_stage1.1} parent=0 // pred_region
    _
  $region9: #{_device_stage1.1} parent=0 // pred_fallthru
    _
  // Predicated region
  $region10: #{_device_stage1.1} parent=0 // pred_check
    _
  $region11: #{_device_stage1.1} parent=0 // pred_check_branch
    %17 = sbr.rel (0) target = $region13
  $region12: #{_device_stage1.1} parent=0 // pred_region
    _
  $region13: #{_device_stage1.1} parent=0 // pred_fallthru
    _
  // Predicated region
  $region14: #{_device_stage1.1} parent=0 // pred_check
    _
  $region15: #{_device_stage1.1} parent=0 // pred_check_branch
    %19 = sbr.rel (0) target = $region17
  $region16: #{_device_stage1.1} parent=0 // pred_region
    _
  $region17: #{_device_stage1.1} parent=0 // pred_fallthru
    _
  // Predicated region
  $region18: #{_device_stage1.1} parent=0 // pred_check
    _
  $region19: #{_device_stage1.1} parent=0 // pred_check_branch
    %21 = sbr.rel (0) target = $region21
  $region20: #{_device_stage1.1} parent=0 // pred_region
    _
  $region21: #{_device_stage1.1} parent=0 // pred_fallthru
    _
  %v23 = vld [vmem:[%s0] sm:$0xff]
  %v24 = vld [vmem:[%s0 + $0x8] sm:$0xff]
  %v25 = vld [vmem:[%s0 + $0x10] sm:$0xff]
  %v26 = vld [vmem:[%s1] sm:$0xff]
  %28 = vset.pattern.permute.xlu0 0
  %29 = vperm.xlu0 %28, %v23
  %v30 = vpop.permute.xlu0 %29
  %33 = vset.pattern.permute.xlu0 0
  %34 = vperm.xlu0 %33, %v24
  %v35 = vpop.permute.xlu0 %34
  %38 = vset.pattern.permute.xlu0 0
  %39 = vperm.xlu0 %38, %v25
  %v40 = vpop.permute.xlu0 %39
  %v42 = vperm.slane %v26, 0
  %v43 = vsub.f32 %v30, %v42
  %v44 = vsub.f32 %v35, %v42
  %v45 = vsub.f32 %v40, %v42
  %46 = vset.pattern.permute.xlu0 1
  %47 = vperm.xlu0 %46, %v23
  %v48 = vpop.permute.xlu0 %47
  %50 = vset.pattern.permute.xlu0 1
  %51 = vperm.xlu0 %50, %v24
  %v52 = vpop.permute.xlu0 %51
  %54 = vset.pattern.permute.xlu0 1
  %55 = vperm.xlu0 %54, %v25
  %v56 = vpop.permute.xlu0 %55
  %v58 = vperm.slane %v26, 1
  %v59 = vsub.f32 %v48, %v58
  %v60 = vsub.f32 %v52, %v58
  %v61 = vsub.f32 %v56, %v58
  %62 = vset.pattern.permute.xlu0 2
  %63 = vperm.xlu0 %62, %v23
  %v64 = vpop.permute.xlu0 %63
  %66 = vset.pattern.permute.xlu0 2
  %67 = vperm.xlu0 %66, %v24
  %v68 = vpop.permute.xlu0 %67
  %70 = vset.pattern.permute.xlu0 2
  %71 = vperm.xlu0 %70, %v25
  %v72 = vpop.permute.xlu0 %71
  %v74 = vperm.slane %v26, 2
  %v75 = vsub.f32 %v64, %v74
  %v76 = vsub.f32 %v68, %v74
  %v77 = vsub.f32 %v72, %v74
  %v78 = vmul.f32 %v43, %v43
  %v79 = vmul.f32 %v44, %v44
  %v80 = vmul.f32 %v45, %v45
  %v81 = vmul.f32 %v59, %v59
  %v82 = vmul.f32 %v60, %v60
  %v83 = vmul.f32 %v61, %v61
  %v84 = vadd.f32 %v78, %v81
  %v85 = vadd.f32 %v79, %v82
  %v86 = vadd.f32 %v80, %v83
  %v87 = vmul.f32 %v75, %v75
  %v88 = vmul.f32 %v76, %v76
  %v89 = vmul.f32 %v77, %v77
  %v90 = vadd.f32 %v84, %v87
  %v91 = vadd.f32 %v85, %v88
  %v92 = vadd.f32 %v86, %v89
  %v93 = vrsqrt.pop %v90
  %v94 = vmul.f32 %v93, %v90
  %v95 = vmul.f32 %v94, %v93
  %v96 = vmul.f32 0.5, %v95
  %v97 = vsub.f32 1.5, %v96
  %v98 = vmul.f32 %v93, %v97
  %v99 = vmul.f32 %v90, %v98
  %vm100 = vcmp.eq.f32.partialorder %v90, inf
  %v101 = vsel %vm100, %v90, %v99
  %vm102 = vcmp.eq.f32.partialorder %v90, 0.0
  %v103 = vand.u32 %v90, 2147483648
  %v104 = vsel %vm102, %v103, %v101
  %v105 = vrsqrt.pop %v91
  %v106 = vmul.f32 %v105, %v91
  %v107 = vmul.f32 %v106, %v105
  %v108 = vmul.f32 0.5, %v107
  %v109 = vsub.f32 1.5, %v108
  %v110 = vmul.f32 %v105, %v109
  %v111 = vmul.f32 %v91, %v110
  %vm112 = vcmp.eq.f32.partialorder %v91, inf
  %v113 = vsel %vm112, %v91, %v111
  %vm114 = vcmp.eq.f32.partialorder %v91, 0.0
  %v115 = vand.u32 %v91, 2147483648
  %v116 = vsel %vm114, %v115, %v113
  %v117 = vrsqrt.pop %v92
  %v118 = vmul.f32 %v117, %v92
  %v119 = vmul.f32 %v118, %v117
  %v120 = vmul.f32 0.5, %v119
  %v121 = vsub.f32 1.5, %v120
  %v122 = vmul.f32 %v117, %v121
  %v123 = vmul.f32 %v92, %v122
  %vm124 = vcmp.eq.f32.partialorder %v92, inf
  %v125 = vsel %vm124, %v92, %v123
  %vm126 = vcmp.eq.f32.partialorder %v92, 0.0
  %v127 = vand.u32 %v92, 2147483648
  %v128 = vsel %vm126, %v127, %v125
  %v129 = vmul.f32 %v23, 1.442695
  %v130 = vpow.pop %v129
  %v131 = vmul.f32 %v24, 1.442695
  %v132 = vpow.pop %v131
  %v133 = vmul.f32 %v25, 1.442695
  %v134 = vpow.pop %v133
  %v135 = vand.u32 2147483647, %v43
  %v136 = vand.u32 2147483647, %v44
  %v137 = vand.u32 2147483647, %v45
  %139 = vset.pattern.permute.xlu0 3
  %140 = vperm.xlu0 %139, %v130
  %v141 = vpop.permute.xlu0 %140
  %144 = vset.pattern.permute.xlu0 3
  %145 = vperm.xlu0 %144, %v132
  %v146 = vpop.permute.xlu0 %145
  %149 = vset.pattern.permute.xlu0 3
  %150 = vperm.xlu0 %149, %v134
  %v151 = vpop.permute.xlu0 %150
  %vm153 = vcmp.le.f32.partialorder %v135, %v141
  %vm154 = vcmp.le.f32.partialorder %v136, %v146
  %vm155 = vcmp.le.f32.partialorder %v137, %v151
  %v156 = vand.u32 2147483647, %v59
  %v157 = vand.u32 2147483647, %v60
  %v158 = vand.u32 2147483647, %v61
  %159 = vset.pattern.permute.xlu0 4
  %160 = vperm.xlu0 %159, %v130
  %v161 = vpop.permute.xlu0 %160
  %163 = vset.pattern.permute.xlu0 4
  %164 = vperm.xlu0 %163, %v132
  %v165 = vpop.permute.xlu0 %164
  %167 = vset.pattern.permute.xlu0 4
  %168 = vperm.xlu0 %167, %v134
  %v169 = vpop.permute.xlu0 %168
  %vm171 = vcmp.le.f32.partialorder %v156, %v161
  %vm172 = vcmp.le.f32.partialorder %v157, %v165
  %vm173 = vcmp.le.f32.partialorder %v158, %v169
  %vm174 = vmand %vm153, %vm171
  %vm175 = vmand %vm154, %vm172
  %vm176 = vmand %vm155, %vm173
  %v177 = vand.u32 2147483647, %v75
  %v178 = vand.u32 2147483647, %v76
  %v179 = vand.u32 2147483647, %v77
  %180 = vset.pattern.permute.xlu0 5
  %181 = vperm.xlu0 %180, %v130
  %v182 = vpop.permute.xlu0 %181
  %184 = vset.pattern.permute.xlu0 5
  %185 = vperm.xlu0 %184, %v132
  %v186 = vpop.permute.xlu0 %185
  %188 = vset.pattern.permute.xlu0 5
  %189 = vperm.xlu0 %188, %v134
  %v190 = vpop.permute.xlu0 %189
  %vm192 = vcmp.le.f32.partialorder %v177, %v182
  %vm193 = vcmp.le.f32.partialorder %v178, %v186
  %vm194 = vcmp.le.f32.partialorder %v179, %v190
  %vm195 = vmand %vm174, %vm192
  %vm196 = vmand %vm175, %vm193
  %vm197 = vmand %vm176, %vm194
  %vm198 = vcmp.gt.f32.partialorder %v23, 0.5
  %vm199 = vcmp.gt.f32.partialorder %v24, 0.5
  %vm200 = vcmp.gt.f32.partialorder %v25, 0.5
  %v201 = vsel %vm198, 1, 0
  %v202 = vsel %vm199, 1, 0
  %v203 = vsel %vm200, 1, 0
  %204 = vset.pattern.permute.xlu0 6
  %205 = vperm.xlu0 %204, %v201
  %v206 = vpop.permute.xlu0 %205
  %207 = vset.pattern.permute.xlu0 6
  %208 = vperm.xlu0 %207, %v202
  %v209 = vpop.permute.xlu0 %208
  %210 = vset.pattern.permute.xlu0 6
  %211 = vperm.xlu0 %210, %v203
  %v212 = vpop.permute.xlu0 %211
  %vm213 = vcmp.eq.s32.totalorder %v206, 1
  %vm214 = vcmp.eq.s32.totalorder %v209, 1
  %vm215 = vcmp.eq.s32.totalorder %v212, 1
  %vm216 = vmand %vm195, %vm213
  %vm217 = vmand %vm196, %vm214
  %vm218 = vmand %vm197, %vm215
  %v219 = vsel %vm216, %v104, 1000000.0
  %v220 = vsel %vm217, %v116, 1000000.0
  %v221 = vsel %vm218, %v128, 1000000.0
  %222 = vst [vmem:[%s5] sm:$0xff] %v219
  %223 = vst [vmem:[%s5 + $0x8] sm:$0xff] %v220
  %224 = vst [vmem:[%s5 + $0x10] sm:$0xff] %v221
  %p225 = scmp.eq.s32.totalorder 0, 0
  // Predicated region
  $region22: #{_device_stage1.1} parent=0 // pred_check
    %p226 = pneg %p225
  $region23: #{_device_stage1.1} parent=0 // pred_check_branch
    %228 = sbr.rel (%p226) target = $region25
  $region24: #{_device_stage1.1} parent=0 // pred_region
    %v229 = vld [vmem:[%s2] sm:$0xf]
    %v230 = vld [vmem:[%s3] sm:$0xf]
    %v231 = vld [vmem:[%s3 + $0x4] sm:$0xf]
    %v232 = vld [vmem:[%s3 + $0x8] sm:$0xf]
    %v233 = vld [vmem:[%s3 + $0xc] sm:$0xf]
    %v234 = vld [vmem:[%s3 + $0x10] sm:$0xf]
    %v235 = vld [vmem:[%s3 + $0x14] sm:$0xf]
    %v236 = vld [vmem:[%s3 + $0x18] sm:$0xf]
    %v237 = vld [vmem:[%s3 + $0x1c] sm:$0xf]
    %v238 = vld [vmem:[%s4] sm:$0x1]
    %v240 = vperm.slane %v238, 0
    %v250 = vunpack.c.l.b16 %v230
    %v251 = vunpack.c.l.b16 %v231
    %v252 = vunpack.c.l.b16 %v232
    %v253 = vunpack.c.l.b16 %v233
    %v254 = vunpack.c.l.b16 %v234
    %v255 = vunpack.c.l.b16 %v235
    %v256 = vunpack.c.l.b16 %v236
    %v257 = vunpack.c.l.b16 %v237
    %v258 = vpack.c.b16 %v251, %v250
    %v259 = vpack.c.b16 %v253, %v252
    %v260 = vpack.c.b16 %v255, %v254
    %v261 = vpack.c.b16 %v257, %v256
    %vm266 = vcmask 523264
    %v268 = vsel %vm266, %v229, 0
    %270 = vmatpush.bf16.msra.mxu0 0
    %271 = vmatpush.bf16.msra.mxu0 0
    %272 = vmatpush.bf16.msra.mxu0 0
    %273 = vmatpush.bf16.msra.mxu0 0
    %274 = vmatpush.bf16.msra.mxu0 %v261
    %275 = vmatpush.bf16.msra.mxu0 %v260
    %276 = vmatpush.bf16.msra.mxu0 %v259
    %277 = vmatpush.bf16.msra.mxu0 %v258
    %278 = vmatmul.bf16.gmra.mxu0 %v268
    %v279 = vpop.f32.mrf.mxu0
    %v280 = vadd.f32 %v240, %v279
    %v281 = vpop.f32.mrf.mxu0
    %282 = vdwg.mxu0
    %283 = vst [vmem:[%s6] sm:$0xff] %v280
  $region25: #{_device_stage1.1} parent=0 // pred_fallthru
    _
  // Predicated region
  $region26: #{_device_stage1.1} parent=0 // pred_check
    _
  $region27: #{_device_stage1.1} parent=0 // pred_check_branch
    %285 = sbr.rel (0) target = $region29
  $region28: #{_device_stage1.1} parent=0 // pred_region
    _
  $region29: #{_device_stage1.1} parent=0 // pred_fallthru
    _
  // Predicated region
  $region30: #{_device_stage1.1} parent=0 // pred_check
    _
  $region31: #{_device_stage1.1} parent=0 // pred_check_branch
    %287 = sbr.rel (0) target = $region33
  $region32: #{_device_stage1.1} parent=0 // pred_region
    _
  $region33: #{_device_stage1.1} parent=0 // pred_fallthru
    _
  // Predicated region
  $region34: #{_device_stage1.1} parent=0 // pred_check
    _
  $region35: #{_device_stage1.1} parent=0 // pred_check_branch
    %289 = sbr.rel (0) target = $region37
  $region36: #{_device_stage1.1} parent=0 // pred_region
    _
  $region37: #{_device_stage1.1} parent=0 // pred_fallthru
    _
  // Predicated region
  $region38: #{_device_stage1.1} parent=0 // pred_check
    _
  $region39: #{_device_stage1.1} parent=0 // pred_check_branch
    %291 = sbr.rel (0) target = $region41
  $region40: #{_device_stage1.1} parent=0 // pred_region
    _
  $region41: #{_device_stage1.1} parent=0 // pred_fallthru
    _

</llo_original>
